<compile_context>
chip_gen: v5e
topology: v5e:2x2
jax: 0.10.0
libtpu: 0.0.40
codegen_flags: <defaults>
</compile_context>

<pallas_src>
import functools

import numpy as np
import jax
import jax.numpy as jnp
from jax.experimental import pallas as pl
from jax.experimental.pallas import tpu as pltpu


def _round_up(x, m):
    return ((x + m - 1) // m) * m


def _corr_kernel(a_ref, b_ref, o_ref):
    # a_ref: (1, tm, c)  — A positions on sublanes, channels on lanes.
    # b_ref: (1, c, tn)  — channels on sublanes, B positions on lanes.
    # Plain (tm, c) x (c, tn) matmul -> native MXU, f32 accumulate; cast to the
    # (possibly bf16) output dtype happens right before the lane-dense store.
    o_ref[0] = jnp.dot(
        a_ref[0], b_ref[0], preferred_element_type=jnp.float32
    ).astype(o_ref.dtype)


def _vmem_budget_bytes():
    # Per-generation VMEM budget with ~25% headroom for Mosaic internal
    # scratch (v7x: 64 MiB/TC -> ~48 MiB; v5e/v6e: 128 MiB -> ~96 MiB).
    try:
        cap = pltpu.get_tpu_info().vmem_capacity_bytes
    except Exception:  # conservative fallback if the query is unavailable
        cap = 64 << 20
    return int(cap) * 3 // 4


@functools.partial(jax.jit, static_argnames=("use_bf16", "out_dtype"))
def correlation_volume_flat(feature_A, feature_B, *, use_bf16=False,
                            out_dtype=jnp.float32):
    """Lane-dense correlation slab: out[b, k, m] = sum_c A'[b,c,k] * B'[b,c,m].

    Returns (b, h*w, h*w) with k = w_idx*h + h_idx (A position, PyTorch order)
    and m = i*w + j (B position). This is exactly what the kernel writes, so
    no extra HBM pass is taken over the dominant output tensor.
    """
    b, c, h, w = feature_A.shape
    hw = h * w

    in_dtype = jnp.bfloat16 if use_bf16 else jnp.float32
    in_bytes = 2 if use_bf16 else 4
    out_bytes = np.dtype(out_dtype).itemsize

    # Wrapper-side layout glue (single small pass over the inputs):
    #   A -> (b, hw, c) with k = w_idx*h + h_idx  (matches transpose(2,3).view)
    #   B -> (b, c, hw) with m = i*w + j          (row-major flatten)
    a2 = jnp.transpose(feature_A, (0, 3, 2, 1)).reshape(b, hw, c).astype(in_dtype)
    b2 = feature_B.reshape(b, c, hw).astype(in_dtype)

    # Pad only when needed (common c=256, h=w=16 case needs no padding).
    c_mult = 16 if use_bf16 else 8
    c_p = _round_up(c, c_mult)
    hw_p = _round_up(hw, 128)
    if c_p != c or hw_p != hw:
        a2 = jnp.pad(a2, ((0, 0), (0, hw_p - hw), (0, c_p - c)))
        b2 = jnp.pad(b2, ((0, 0), (0, c_p - c), (0, hw_p - hw)))

    # Largest square tile that divides hw_p and fits the per-generation VMEM
    # budget (double-buffered A/B input tiles + double-buffered output tile).
    vmem_budget = _vmem_budget_bytes()

    def footprint(t):
        return 2 * 2 * (t * c_p * in_bytes) + 2 * t * t * out_bytes

    tile = 128
    for t in (1024, 512, 256, 128):
        if hw_p % t == 0 and footprint(t) <= vmem_budget:
            tile = t
            break
    # TODO(synk): for very large c (when c_p * tile tiles no longer fit the
    # VMEM budget) add a trailing "arbitrary" reduction grid axis over c with
    # a pl.when-initialized f32 VMEM accumulator.

    # hw_A tile axis leads so megacore (v7x) splits real work even when b==1;
    # j innermost keeps the A tile resident across the inner loop.
    grid = (hw_p // tile, b, hw_p // tile)

    vmem_limit = int(min(vmem_budget,
                         max(footprint(tile) + (4 << 20), 32 << 20)))

    cost = pl.CostEstimate(
        flops=2 * b * hw_p * hw_p * c_p,
        transcendentals=0,
        bytes_accessed=(2 * b * hw_p * c_p * in_bytes
                        + b * hw_p * hw_p * out_bytes),
    )

    corr = pl.pallas_call(
        _corr_kernel,
        out_shape=jax.ShapeDtypeStruct((b, hw_p, hw_p), out_dtype),
        grid_spec=pltpu.PrefetchScalarGridSpec(
            num_scalar_prefetch=0,
            grid=grid,
            in_specs=[
                pl.BlockSpec((1, tile, c_p), lambda i, bi, j: (bi, i, 0)),
                pl.BlockSpec((1, c_p, tile), lambda i, bi, j: (bi, 0, j)),
            ],
            out_specs=pl.BlockSpec((1, tile, tile), lambda i, bi, j: (bi, i, j)),
        ),
        compiler_params=pltpu.CompilerParams(
            dimension_semantics=("parallel", "parallel", "parallel"),
            vmem_limit_bytes=vmem_limit,
        ),
        cost_estimate=cost,
    )(a2, b2)

    if hw_p != hw:
        corr = corr[:, :hw, :hw]   # strip zero padding (only when padded)
    return corr


@functools.partial(jax.jit, static_argnames=("use_bf16", "out_dtype"))
def correlation_volume(feature_A, feature_B, *, use_bf16=False,
                       out_dtype=jnp.float32):
    """Pallas TPU forward of CorrelationVolume, matching the PyTorch module.

    Returns (b, h*w, h, w) with channel k = w_idx*h + h_idx. The final reshape
    only splits the trailing flat axis; bandwidth-sensitive consumers should
    call `correlation_volume_flat` and index (i, j) = divmod(m, w) themselves
    to stay lane-dense and avoid the narrow-minor-dim relayout.
    """
    b, c, h, w = feature_A.shape
    corr = correlation_volume_flat(feature_A, feature_B,
                                   use_bf16=use_bf16, out_dtype=out_dtype)
    return corr.reshape(b, h * w, h, w)


def _reference(feature_A, feature_B):
    """Pure-JAX transcription of the PyTorch forward (f32)."""
    b, c, h, w = feature_A.shape
    fa = jnp.transpose(feature_A, (0, 1, 3, 2)).reshape(b, c, h * w)
    fb = jnp.transpose(feature_B.reshape(b, c, h * w), (0, 2, 1))
    mul = jnp.einsum("bmc,bck->bmk", fb, fa)                  # (b, hw_B, hw_A)
    return jnp.transpose(mul.reshape(b, h, w, h * w), (0, 3, 1, 2))


if __name__ == "__main__":
    key = jax.random.PRNGKey(0)
    ka, kb = jax.random.split(key)
    bsz, c, h, w = 2, 4, 16, 16
    feature_A = jax.random.normal(ka, (bsz, c, h, w), dtype=jnp.float32)
    feature_B = jax.random.normal(kb, (bsz, c, h, w), dtype=jnp.float32)

    out = correlation_volume(feature_A, feature_B)   # f32 parity path (default)
    out = jax.block_until_ready(out)

    ref = _reference(feature_A, feature_B)
    assert out.shape == (bsz, h * w, h, w), out.shape
    if not jnp.allclose(out, ref, rtol=5e-2, atol=5e-2):
        raise AssertionError("Pallas correlation volume mismatch vs reference")
    print("KERNEL_OK")
</pallas_src>

<mosaic_0001>
module attributes {stable_mosaic.version = 11 : i64} {
  func.func @_corr_kernel(%arg0: i32, %arg1: i32, %arg2: i32, %arg3: memref<1x256x8xf32, #tpu.memory_space<vmem>>, %arg4: memref<1x8x256xf32, #tpu.memory_space<vmem>>, %arg5: memref<1x256x256xf32, #tpu.memory_space<vmem>>) attributes {dimension_semantics = [#tpu.dimension_semantics<parallel>, #tpu.dimension_semantics<parallel>, #tpu.dimension_semantics<parallel>], iteration_bounds = array<i64: 1, 2, 1>, scalar_prefetch = 0 : i64, scratch_operands = 0 : i64, tpu.core_type = #tpu.core_type<tc>, window_params = [{transform_indices = @transform_0, window_bounds = array<i64: 1, 256, 8>}, {transform_indices = @transform_1, window_bounds = array<i64: 1, 8, 256>}, {transform_indices = @transform_2, window_bounds = array<i64: 1, 256, 256>}]} {
    %c0 = arith.constant 0 : index
    %c0_0 = arith.constant 0 : index
    %c0_1 = arith.constant 0 : index
    %0 = vector.load %arg3[%c0, %c0_0, %c0_1] : memref<1x256x8xf32, #tpu.memory_space<vmem>>, vector<1x256x8xf32>
    %1 = vector.shape_cast %0 : vector<1x256x8xf32> to vector<256x8xf32>
    %c0_2 = arith.constant 0 : index
    %c0_3 = arith.constant 0 : index
    %c0_4 = arith.constant 0 : index
    %2 = vector.load %arg4[%c0_2, %c0_3, %c0_4] : memref<1x8x256xf32, #tpu.memory_space<vmem>>, vector<1x8x256xf32>
    %3 = vector.shape_cast %2 : vector<1x8x256xf32> to vector<8x256xf32>
    %cst = arith.constant dense<0.000000e+00> : vector<256x256xf32>
    %4 = tpu.matmul %1, %3, %cst {dimension_numbers = #tpu.dot_dimension_numbers<[1], [0], [0], [1], [0, 0, 1, 1], [], []>} : vector<256x8xf32>, vector<8x256xf32>, vector<256x256xf32> -> vector<256x256xf32>
    %c0_5 = arith.constant 0 : index
    %c0_6 = arith.constant 0 : index
    %c0_7 = arith.constant 0 : index
    %5 = vector.load %arg5[%c0_5, %c0_6, %c0_7] : memref<1x256x256xf32, #tpu.memory_space<vmem>>, vector<1x256x256xf32>
    %6 = vector.shape_cast %5 : vector<1x256x256xf32> to vector<256x256xf32>
    %7 = vector.shape_cast %4 : vector<256x256xf32> to vector<1x256x256xf32>
    tpu.vector_store %arg5[%c0_5, %c0_6, %c0_7], %7 {strides = array<i32>} : memref<1x256x256xf32, #tpu.memory_space<vmem>>, vector<1x256x256xf32>,
    return
  }
  func.func @transform_0(%arg0: i32, %arg1: i32, %arg2: i32) -> (i32, i32, i32) {
    %c0_i32 = arith.constant 0 : i32
    %c0_i32_0 = arith.constant 0 : i32
    return %arg1, %arg0, %c0_i32 : i32, i32, i32
  }
  func.func @transform_1(%arg0: i32, %arg1: i32, %arg2: i32) -> (i32, i32, i32) {
    %c0_i32 = arith.constant 0 : i32
    %c0_i32_0 = arith.constant 0 : i32
    return %arg1, %c0_i32, %arg2 : i32, i32, i32
  }
  func.func @transform_2(%arg0: i32, %arg1: i32, %arg2: i32) -> (i32, i32, i32) {
    %c0_i32 = arith.constant 0 : i32
    return %arg1, %arg0, %arg2 : i32, i32, i32
  }
}

</mosaic_0001>

<llo_original>
// kernel: correlation_volume_flat.1
$region0: #{correlation_volume_flat.1}
  #allocation0 [shape = 'u32[]', space=smem, size = 0x4, offset = 0x4, fixed_abs, tag = 'smem constant byte address 0x4 - core index']
  #allocation1 [shape = 'u32[72,128]{1,0:T(1,128)}', space=vmem, size = 0x9000, scoped, tag = 'internal scratch']
  %s0 = inlined_call_operand.vmem [shape: f32[2,256,8], index: 0, kind: input, shape index: {}]
  %s1 = inlined_call_operand.vmem [shape: f32[2,8,256], index: 1, kind: input, shape index: {}]
  %s2 = inlined_call_operand.hbm [shape: f32[2,256,256], index: 2, kind: output, shape index: {}]
  %s3 = sld [smem:[#allocation0]]
  $region41: #{correlation_volume_flat.1} parent=0
    _
  %s5 = ssub.s32 1, %s3
  %s6 = scalar_select 0, %s5, %s3
  $region1: #{correlation_volume_flat.1} parent=0
    #allocation2 [shape = 'u8[524288]{0}', space=vmem, size = 0x80000, scoped, tag = 'output window, operand 0']
    #allocation3 [shape = 's32[2]{0}', space=sflag, size = 0x8, scoped, tag = 'scoped memory for correlation_volume_flat.1']
    %7 = vsyncpa [#allocation3], 0
    %s8 = scalar_lea.sflag [#allocation3], 1
    %9 = vsyncpa %s8, 0
    loop: start=0, step=1, limit=4
    $region2: #{correlation_volume_flat.1} parent=1 // loop_pre_header
      _
    $region3: #{correlation_volume_flat.1} parent=1 // loop_header
      %s11 = sphi 0, %s15
      %p12 = scmp.ge.s32.totalorder %s11, 4
      %s18 = sphi 0, %s37
      %s19 = sphi 0, %s33
      %s20 = sphi 0, %s29
      %s21 = sphi 0, %s18
      %s22 = sphi 0, %s19
      %s23 = sphi 0, %s20
      %s24 = sphi 0, %s21
      %s25 = sphi 0, %s22
      %s26 = sphi 0, %s23
      %s42 = sphi 0, %s44
      %s45 = sphi 0, %s42
      %s46 = sphi 0, %s45
      %s62 = sphi 0, %s46
      %s70 = sphi 0, %s72
      %s73 = sphi 0, %s70
      %s74 = sphi 0, %s73
      %s90 = sphi 0, %s74
      %s100 = sphi 0, %s102
      %s103 = sphi 0, %s100
      %s104 = sphi 0, %s103
      %s120 = sphi 0, %s104
    $region4: #{correlation_volume_flat.1} parent=1 // loop_header_branch
      %14 = sbr.rel (%p12) target = $region8
    $region5: #{correlation_volume_flat.1} parent=1 // loop_body
      %s16 = ssub.s32 %s11, 1
      %s17 = ssub.s32 %s11, 2
      %s27 = sadd.s32 1, %s20
      %p28 = scmp.ge.s32.totalorder %s27, 1
      %s29 = scalar_select %p28, 0, %s27
      %s30 = sadd.s32 1, %s19
      %s31 = scalar_select %p28, %s30, %s19
      %p32 = scmp.ge.s32.totalorder %s31, 2
      %s33 = scalar_select %p32, 0, %s31
      %s34 = sadd.s32 1, %s18
      %s35 = scalar_select %p32, %s34, %s18
      %p36 = scmp.ge.s32.totalorder %s35, 1
      %s37 = scalar_select %p36, 0, %s35
      %s38 = ssub.s32 %s19, %s33
      %s39 = ssub.s32 %s18, %s37
      %s40 = sor.u32 %s38, %s39
      %p41 = scmp.eq.s32.totalorder %s40, 0
      %s43 = sadd.s32 %s42, 1
      %s44 = scalar_select %p41, %s42, %s43
      %p47 = pneg %p41
      %p48 = scmp.eq.s32.totalorder %s11, 1
      %p49 = por %p47, %p48
      %p50 = scmp.ne.s32.totalorder %s42, %s45
      %p51 = scmp.eq.s32.totalorder %s11, 0
      %p52 = por %p50, %p51
      %p53 = scmp.ne.s32.totalorder %s42, %s45
      %p54 = scmp.eq.s32.totalorder %s16, 1
      %p55 = por %p53, %p54
      %p56 = scmp.ne.s32.totalorder %s45, %s46
      %p57 = scmp.eq.s32.totalorder %s16, 0
      %p58 = por %p56, %p57
      %p59 = scmp.ne.s32.totalorder %s45, %s46
      %p60 = scmp.eq.s32.totalorder %s17, 1
      %p61 = por %p59, %p60
      %p63 = scmp.ne.s32.totalorder %s46, %s62
      %p64 = scmp.eq.s32.totalorder %s17, 0
      %p65 = por %p63, %p64
      %s66 = ssub.s32 %s19, %s33
      %s67 = ssub.s32 %s20, %s29
      %s68 = sor.u32 %s66, %s67
      %p69 = scmp.eq.s32.totalorder %s68, 0
      %s71 = sadd.s32 %s70, 1
      %s72 = scalar_select %p69, %s70, %s71
      %p75 = pneg %p69
      %p76 = scmp.eq.s32.totalorder %s11, 1
      %p77 = por %p75, %p76
      %p78 = scmp.ne.s32.totalorder %s70, %s73
      %p79 = scmp.eq.s32.totalorder %s11, 0
      %p80 = por %p78, %p79
      %p81 = scmp.ne.s32.totalorder %s70, %s73
      %p82 = scmp.eq.s32.totalorder %s16, 1
      %p83 = por %p81, %p82
      %p84 = scmp.ne.s32.totalorder %s73, %s74
      %p85 = scmp.eq.s32.totalorder %s16, 0
      %p86 = por %p84, %p85
      %p87 = scmp.ne.s32.totalorder %s73, %s74
      %p88 = scmp.eq.s32.totalorder %s17, 1
      %p89 = por %p87, %p88
      %p91 = scmp.ne.s32.totalorder %s74, %s90
      %p92 = scmp.eq.s32.totalorder %s17, 0
      %p93 = por %p91, %p92
      %s94 = ssub.s32 %s19, %s33
      %s95 = ssub.s32 %s18, %s37
      %s96 = sor.u32 %s94, %s95
      %s97 = ssub.s32 %s20, %s29
      %s98 = sor.u32 %s96, %s97
      %p99 = scmp.eq.s32.totalorder %s98, 0
      %s101 = sadd.s32 %s100, 1
      %s102 = scalar_select %p99, %s100, %s101
      %p105 = pneg %p99
      %p106 = scmp.eq.s32.totalorder %s11, 1
      %p107 = por %p105, %p106
      %p108 = scmp.ne.s32.totalorder %s100, %s103
      %p109 = scmp.eq.s32.totalorder %s11, 0
      %p110 = por %p108, %p109
      %p111 = scmp.ne.s32.totalorder %s100, %s103
      %p112 = scmp.eq.s32.totalorder %s16, 1
      %p113 = por %p111, %p112
      %p114 = scmp.ne.s32.totalorder %s103, %s104
      %p115 = scmp.eq.s32.totalorder %s16, 0
      %p116 = por %p114, %p115
      %p117 = scmp.ne.s32.totalorder %s103, %s104
      %p118 = scmp.eq.s32.totalorder %s17, 1
      %p119 = por %p117, %p118
      %p121 = scmp.ne.s32.totalorder %s104, %s120
      %p122 = scmp.eq.s32.totalorder %s17, 0
      %p123 = por %p121, %p122
      %p124 = scmp.le.s32.totalorder 1, %s11
      %p125 = scmp.lt.s32.totalorder %s11, 3
      %p126 = pnand %p124, %p125
      %p127 = pneg %p126
      // Predicated region
      $region9: #{correlation_volume_flat.1} parent=5 // pred_check
        _
      $region10: #{correlation_volume_flat.1} parent=5 // pred_check_branch
        %129 = sbr.rel (%p126) target = $region12
      $region11: #{correlation_volume_flat.1} parent=5 // pred_region
        %s130 = ssub.s32 %s11, 1
      $region12: #{correlation_volume_flat.1} parent=5 // pred_fallthru
        _
      %p131 = scmp.lt.s32.totalorder %s11, 2
      // Predicated region
      $region13: #{correlation_volume_flat.1} parent=5 // pred_check
        %p132 = pneg %p131
      $region14: #{correlation_volume_flat.1} parent=5 // pred_check_branch
        %134 = sbr.rel (%p132) target = $region16
      $region15: #{correlation_volume_flat.1} parent=5 // pred_region
        // Predicated region
        $region17: #{correlation_volume_flat.1} parent=15 // pred_check
          %p135 = pneg %p52
        $region18: #{correlation_volume_flat.1} parent=15 // pred_check_branch
          %137 = sbr.rel (%p135) target = $region20
        $region19: #{correlation_volume_flat.1} parent=15 // pred_region
          %s138 = smul.u32 32, %s18
          %p139 = scmp.lt.s32.totalorder %s19, 1
          %s140 = scalar_select %p139, %s19, 1
          %p141 = scmp.lt.s32.totalorder %s138, 31
          %s142 = scalar_select %p141, %s138, 31
          %s143 = smul.addr %s140, 32
          %s144 = sadd.s32 %s142, %s143
          %s145 = smul.addr %s144, 8
          %s146 = scalar_lea.vmem %s0, %s145
          %s147 = smul.u32 32, %s18
        $region20: #{correlation_volume_flat.1} parent=15 // pred_fallthru
          _
        // Predicated region
        $region21: #{correlation_volume_flat.1} parent=15 // pred_check
          %p148 = pneg %p80
        $region22: #{correlation_volume_flat.1} parent=15 // pred_check_branch
          %150 = sbr.rel (%p148) target = $region24
        $region23: #{correlation_volume_flat.1} parent=15 // pred_region
          %s151 = smul.u32 2, %s20
          %p152 = scmp.lt.s32.totalorder %s19, 1
          %s153 = scalar_select %p152, %s19, 1
          %p154 = scmp.lt.s32.totalorder %s151, 1
          %s155 = scalar_select %p154, %s151, 1
          %s156 = smul.addr %s153, 2
          %s157 = sadd.s32 %s155, %s156
          %s158 = smul.addr %s157, 8
          %s159 = scalar_lea.vmem %s1, %s158
          %s160 = smul.u32 2, %s20
        $region24: #{correlation_volume_flat.1} parent=15 // pred_fallthru
          _
      $region16: #{correlation_volume_flat.1} parent=5 // pred_fallthru
        _
      %p161 = scmp.le.s32.totalorder 1, %s11
      %p162 = scmp.lt.s32.totalorder %s11, 3
      %p163 = pnand %p161, %p162
      %p164 = pneg %p163
      // Predicated region
      $region25: #{correlation_volume_flat.1} parent=5 // pred_check
        _
      $region26: #{correlation_volume_flat.1} parent=5 // pred_check_branch
        %166 = sbr.rel (%p163) target = $region28
      $region27: #{correlation_volume_flat.1} parent=5 // pred_region
        %s167 = ssub.s32 %s11, 1
        %s168 = smul.u32 32, %s21
        %p169 = scmp.lt.s32.totalorder %s22, 1
        %s170 = scalar_select %p169, %s22, 1
        %p171 = scmp.lt.s32.totalorder %s168, 31
        %s172 = scalar_select %p171, %s168, 31
        %s173 = smul.addr %s170, 32
        %s174 = sadd.s32 %s172, %s173
        %s175 = smul.addr %s174, 8
        %s176 = scalar_lea.vmem %s0, %s175
        %p177 = pneg %p58
        %p178 = pneg %p55
        %s179 = smul.u32 2, %s23
        %p180 = scmp.lt.s32.totalorder %s22, 1
        %s181 = scalar_select %p180, %s22, 1
        %p182 = scmp.lt.s32.totalorder %s179, 1
        %s183 = scalar_select %p182, %s179, 1
        %s184 = smul.addr %s181, 2
        %s185 = sadd.s32 %s183, %s184
        %s186 = smul.addr %s185, 8
        %s187 = scalar_lea.vmem %s1, %s186
        %p188 = pneg %p86
        %p189 = pneg %p83
        %p190 = pneg %p116
        %p191 = pneg %p113
        %s192 = sand.u32 %s103, 1
        %s193 = scalar_lea.sflag [#allocation3], %s192
        %s194 = sand.u32 %s103, 1
        %s195 = smul.addr %s194, 512
        %s196 = scalar_lea.vmem [#allocation2], %s195
        %s197 = smul.u32 32, %s21
        %p198 = scmp.lt.s32.totalorder %s22, 1
        %s199 = scalar_select %p198, %s22, 1
        %p200 = scmp.lt.s32.totalorder %s197, 31
        %s201 = scalar_select %p200, %s197, 31
        %s202 = smul.addr %s199, 32
        %s203 = sadd.s32 %s201, %s202
        %s204 = smul.addr %s203, 8
        %s205 = scalar_lea.vmem %s0, %s204
        %s206 = smul.u32 32, %s21
        %s207 = smul.u32 2, %s23
        %p208 = scmp.lt.s32.totalorder %s22, 1
        %s209 = scalar_select %p208, %s22, 1
        %p210 = scmp.lt.s32.totalorder %s207, 1
        %s211 = scalar_select %p210, %s207, 1
        %s212 = smul.addr %s209, 2
        %s213 = sadd.s32 %s211, %s212
        %s214 = smul.addr %s213, 8
        %s215 = scalar_lea.vmem %s1, %s214
        %s216 = smul.u32 2, %s23
        %s217 = smul.u32 32, %s21
        %s218 = smul.u32 2, %s23
        %v219 = vld [vmem:[%s205] sm:$0xff]
        %v220 = vld [vmem:[%s205 + $0x8] sm:$0xff]
        %v221 = vld [vmem:[%s205 + $0x10] sm:$0xff]
        %v222 = vld [vmem:[%s205 + $0x18] sm:$0xff]
        %v223 = vld [vmem:[%s205 + $0x20] sm:$0xff]
        %v224 = vld [vmem:[%s205 + $0x28] sm:$0xff]
        %v225 = vld [vmem:[%s205 + $0x30] sm:$0xff]
        %v226 = vld [vmem:[%s205 + $0x38] sm:$0xff]
        %v227 = vld [vmem:[%s205 + $0x40] sm:$0xff]
        %v228 = vld [vmem:[%s205 + $0x48] sm:$0xff]
        %v229 = vld [vmem:[%s205 + $0x50] sm:$0xff]
        %v230 = vld [vmem:[%s205 + $0x58] sm:$0xff]
        %v231 = vld [vmem:[%s205 + $0x60] sm:$0xff]
        %v232 = vld [vmem:[%s205 + $0x68] sm:$0xff]
        %v233 = vld [vmem:[%s205 + $0x70] sm:$0xff]
        %v234 = vld [vmem:[%s205 + $0x78] sm:$0xff]
        %v235 = vld [vmem:[%s205 + $0x80] sm:$0xff]
        %v236 = vld [vmem:[%s205 + $0x88] sm:$0xff]
        %v237 = vld [vmem:[%s205 + $0x90] sm:$0xff]
        %v238 = vld [vmem:[%s205 + $0x98] sm:$0xff]
        %v239 = vld [vmem:[%s205 + $0xa0] sm:$0xff]
        %v240 = vld [vmem:[%s205 + $0xa8] sm:$0xff]
        %v241 = vld [vmem:[%s205 + $0xb0] sm:$0xff]
        %v242 = vld [vmem:[%s205 + $0xb8] sm:$0xff]
        %v243 = vld [vmem:[%s205 + $0xc0] sm:$0xff]
        %v244 = vld [vmem:[%s205 + $0xc8] sm:$0xff]
        %v245 = vld [vmem:[%s205 + $0xd0] sm:$0xff]
        %v246 = vld [vmem:[%s205 + $0xd8] sm:$0xff]
        %v247 = vld [vmem:[%s205 + $0xe0] sm:$0xff]
        %v248 = vld [vmem:[%s205 + $0xe8] sm:$0xff]
        %v249 = vld [vmem:[%s205 + $0xf0] sm:$0xff]
        %v250 = vld [vmem:[%s205 + $0xf8] sm:$0xff]
        %v251 = vld [vmem:[%s215] sm:$0xff]
        %v252 = vld [vmem:[%s215 + $0x8] sm:$0xff]
        %vm253 = vcmask 64512
        %v255 = vsel %vm253, %v219, 0
        %v258 = vsel %vm253, %v220, 0
        %v261 = vsel %vm253, %v221, 0
        %v264 = vsel %vm253, %v222, 0
        %v267 = vsel %vm253, %v223, 0
        %v270 = vsel %vm253, %v224, 0
        %v273 = vsel %vm253, %v225, 0
        %v276 = vsel %vm253, %v226, 0
        %v279 = vsel %vm253, %v227, 0
        %v282 = vsel %vm253, %v228, 0
        %v285 = vsel %vm253, %v229, 0
        %v288 = vsel %vm253, %v230, 0
        %v291 = vsel %vm253, %v231, 0
        %v294 = vsel %vm253, %v232, 0
        %v297 = vsel %vm253, %v233, 0
        %v300 = vsel %vm253, %v234, 0
        %v303 = vsel %vm253, %v235, 0
        %v306 = vsel %vm253, %v236, 0
        %v309 = vsel %vm253, %v237, 0
        %v312 = vsel %vm253, %v238, 0
        %v315 = vsel %vm253, %v239, 0
        %v318 = vsel %vm253, %v240, 0
        %v321 = vsel %vm253, %v241, 0
        %v324 = vsel %vm253, %v242, 0
        %v327 = vsel %vm253, %v243, 0
        %v330 = vsel %vm253, %v244, 0
        %v333 = vsel %vm253, %v245, 0
        %v336 = vsel %vm253, %v246, 0
        %v339 = vsel %vm253, %v247, 0
        %v342 = vsel %vm253, %v248, 0
        %v345 = vsel %vm253, %v249, 0
        %v348 = vsel %vm253, %v250, 0
        %350 = vmatpush.msra.mxu0 0.0
        %351 = vmatpush.msra.mxu0 0.0
        %352 = vmatpush.msra.mxu0 0.0
        %353 = vmatpush.msra.mxu0 0.0
        %354 = vmatpush.msra.mxu0 0.0
        %355 = vmatpush.msra.mxu0 0.0
        %356 = vmatpush.msra.mxu0 0.0
        %357 = vmatpush.msra.mxu0 0.0
        %358 = vmatpush.msra.mxu0 0.0
        %359 = vmatpush.msra.mxu0 0.0
        %360 = vmatpush.msra.mxu0 0.0
        %361 = vmatpush.msra.mxu0 0.0
        %362 = vmatpush.msra.mxu0 0.0
        %363 = vmatpush.msra.mxu0 0.0
        %364 = vmatpush.msra.mxu0 0.0
        %365 = vmatpush.msra.mxu0 %v251
        %366 = vmatmul.f32.gmra.mxu0 %v255
        %v367 = vpop.f32.mrf.mxu0
        %v368 = vadd.f32 0.0, %v367
        %369 = vmatmul.f32.gmra.mxu0 %v258
        %v370 = vpop.f32.mrf.mxu0
        %v371 = vadd.f32 0.0, %v370
        %372 = vmatmul.f32.gmra.mxu0 %v261
        %v373 = vpop.f32.mrf.mxu0
        %v374 = vadd.f32 0.0, %v373
        %375 = vmatmul.f32.gmra.mxu0 %v264
        %v376 = vpop.f32.mrf.mxu0
        %v377 = vadd.f32 0.0, %v376
        %378 = vmatmul.f32.gmra.mxu0 %v267
        %v379 = vpop.f32.mrf.mxu0
        %v380 = vadd.f32 0.0, %v379
        %381 = vmatmul.f32.gmra.mxu0 %v270
        %v382 = vpop.f32.mrf.mxu0
        %v383 = vadd.f32 0.0, %v382
        %384 = vmatmul.f32.gmra.mxu0 %v273
        %v385 = vpop.f32.mrf.mxu0
        %v386 = vadd.f32 0.0, %v385
        %387 = vmatmul.f32.gmra.mxu0 %v276
        %v388 = vpop.f32.mrf.mxu0
        %v389 = vadd.f32 0.0, %v388
        %390 = vmatmul.f32.gmra.mxu0 %v279
        %v391 = vpop.f32.mrf.mxu0
        %v392 = vadd.f32 0.0, %v391
        %393 = vmatmul.f32.gmra.mxu0 %v282
        %v394 = vpop.f32.mrf.mxu0
        %v395 = vadd.f32 0.0, %v394
        %396 = vmatmul.f32.gmra.mxu0 %v285
        %v397 = vpop.f32.mrf.mxu0
        %v398 = vadd.f32 0.0, %v397
        %399 = vmatmul.f32.gmra.mxu0 %v288
        %v400 = vpop.f32.mrf.mxu0
        %v401 = vadd.f32 0.0, %v400
        %402 = vmatmul.f32.gmra.mxu0 %v291
        %v403 = vpop.f32.mrf.mxu0
        %v404 = vadd.f32 0.0, %v403
        %405 = vmatmul.f32.gmra.mxu0 %v294
        %v406 = vpop.f32.mrf.mxu0
        %v407 = vadd.f32 0.0, %v406
        %408 = vmatmul.f32.gmra.mxu0 %v297
        %v409 = vpop.f32.mrf.mxu0
        %v410 = vadd.f32 0.0, %v409
        %411 = vmatmul.f32.gmra.mxu0 %v300
        %v412 = vpop.f32.mrf.mxu0
        %v413 = vadd.f32 0.0, %v412
        %414 = vmatmul.f32.gmra.mxu0 %v303
        %v415 = vpop.f32.mrf.mxu0
        %v416 = vadd.f32 0.0, %v415
        %417 = vmatmul.f32.gmra.mxu0 %v306
        %v418 = vpop.f32.mrf.mxu0
        %v419 = vadd.f32 0.0, %v418
        %420 = vmatmul.f32.gmra.mxu0 %v309
        %v421 = vpop.f32.mrf.mxu0
        %v422 = vadd.f32 0.0, %v421
        %423 = vmatmul.f32.gmra.mxu0 %v312
        %v424 = vpop.f32.mrf.mxu0
        %v425 = vadd.f32 0.0, %v424
        %426 = vmatmul.f32.gmra.mxu0 %v315
        %v427 = vpop.f32.mrf.mxu0
        %v428 = vadd.f32 0.0, %v427
        %429 = vmatmul.f32.gmra.mxu0 %v318
        %v430 = vpop.f32.mrf.mxu0
        %v431 = vadd.f32 0.0, %v430
        %432 = vmatmul.f32.gmra.mxu0 %v321
        %v433 = vpop.f32.mrf.mxu0
        %v434 = vadd.f32 0.0, %v433
        %435 = vmatmul.f32.gmra.mxu0 %v324
        %v436 = vpop.f32.mrf.mxu0
        %v437 = vadd.f32 0.0, %v436
        %438 = vmatmul.f32.gmra.mxu0 %v327
        %v439 = vpop.f32.mrf.mxu0
        %v440 = vadd.f32 0.0, %v439
        %441 = vmatmul.f32.gmra.mxu0 %v330
        %v442 = vpop.f32.mrf.mxu0
        %v443 = vadd.f32 0.0, %v442
        %444 = vmatmul.f32.gmra.mxu0 %v333
        %v445 = vpop.f32.mrf.mxu0
        %v446 = vadd.f32 0.0, %v445
        %447 = vmatmul.f32.gmra.mxu0 %v336
        %v448 = vpop.f32.mrf.mxu0
        %v449 = vadd.f32 0.0, %v448
        %450 = vmatmul.f32.gmra.mxu0 %v339
        %v451 = vpop.f32.mrf.mxu0
        %v452 = vadd.f32 0.0, %v451
        %453 = vmatmul.f32.gmra.mxu0 %v342
        %v454 = vpop.f32.mrf.mxu0
        %v455 = vadd.f32 0.0, %v454
        %456 = vmatmul.f32.gmra.mxu0 %v345
        %v457 = vpop.f32.mrf.mxu0
        %v458 = vadd.f32 0.0, %v457
        %459 = vmatmul.f32.gmra.mxu0 %v348
        %v460 = vpop.f32.mrf.mxu0
        %v461 = vadd.f32 0.0, %v460
        %462 = vdwg.mxu0
        %463 = vmatpush.msra.mxu0 0.0
        %464 = vmatpush.msra.mxu0 0.0
        %465 = vmatpush.msra.mxu0 0.0
        %466 = vmatpush.msra.mxu0 0.0
        %467 = vmatpush.msra.mxu0 0.0
        %468 = vmatpush.msra.mxu0 0.0
        %469 = vmatpush.msra.mxu0 0.0
        %470 = vmatpush.msra.mxu0 0.0
        %471 = vmatpush.msra.mxu0 0.0
        %472 = vmatpush.msra.mxu0 0.0
        %473 = vmatpush.msra.mxu0 0.0
        %474 = vmatpush.msra.mxu0 0.0
        %475 = vmatpush.msra.mxu0 0.0
        %476 = vmatpush.msra.mxu0 0.0
        %477 = vmatpush.msra.mxu0 0.0
        %478 = vmatpush.msra.mxu0 %v252
        %479 = vmatmul.f32.gmra.mxu0 %v255
        %v480 = vpop.f32.mrf.mxu0
        %v481 = vadd.f32 0.0, %v480
        %482 = vmatmul.f32.gmra.mxu0 %v258
        %v483 = vpop.f32.mrf.mxu0
        %v484 = vadd.f32 0.0, %v483
        %485 = vmatmul.f32.gmra.mxu0 %v261
        %v486 = vpop.f32.mrf.mxu0
        %v487 = vadd.f32 0.0, %v486
        %488 = vmatmul.f32.gmra.mxu0 %v264
        %v489 = vpop.f32.mrf.mxu0
        %v490 = vadd.f32 0.0, %v489
        %491 = vmatmul.f32.gmra.mxu0 %v267
        %v492 = vpop.f32.mrf.mxu0
        %v493 = vadd.f32 0.0, %v492
        %494 = vmatmul.f32.gmra.mxu0 %v270
        %v495 = vpop.f32.mrf.mxu0
        %v496 = vadd.f32 0.0, %v495
        %497 = vmatmul.f32.gmra.mxu0 %v273
        %v498 = vpop.f32.mrf.mxu0
        %v499 = vadd.f32 0.0, %v498
        %500 = vmatmul.f32.gmra.mxu0 %v276
        %v501 = vpop.f32.mrf.mxu0
        %v502 = vadd.f32 0.0, %v501
        %503 = vmatmul.f32.gmra.mxu0 %v279
        %v504 = vpop.f32.mrf.mxu0
        %v505 = vadd.f32 0.0, %v504
        %506 = vmatmul.f32.gmra.mxu0 %v282
        %v507 = vpop.f32.mrf.mxu0
        %v508 = vadd.f32 0.0, %v507
        %509 = vmatmul.f32.gmra.mxu0 %v285
        %v510 = vpop.f32.mrf.mxu0
        %v511 = vadd.f32 0.0, %v510
        %512 = vmatmul.f32.gmra.mxu0 %v288
        %v513 = vpop.f32.mrf.mxu0
        %v514 = vadd.f32 0.0, %v513
        %515 = vmatmul.f32.gmra.mxu0 %v291
        %v516 = vpop.f32.mrf.mxu0
        %v517 = vadd.f32 0.0, %v516
        %518 = vmatmul.f32.gmra.mxu0 %v294
        %v519 = vpop.f32.mrf.mxu0
        %v520 = vadd.f32 0.0, %v519
        %521 = vmatmul.f32.gmra.mxu0 %v297
        %v522 = vpop.f32.mrf.mxu0
        %v523 = vadd.f32 0.0, %v522
        %524 = vmatmul.f32.gmra.mxu0 %v300
        %v525 = vpop.f32.mrf.mxu0
        %v526 = vadd.f32 0.0, %v525
        %527 = vmatmul.f32.gmra.mxu0 %v303
        %v528 = vpop.f32.mrf.mxu0
        %v529 = vadd.f32 0.0, %v528
        %530 = vmatmul.f32.gmra.mxu0 %v306
        %v531 = vpop.f32.mrf.mxu0
        %v532 = vadd.f32 0.0, %v531
        %533 = vmatmul.f32.gmra.mxu0 %v309
        %v534 = vpop.f32.mrf.mxu0
        %v535 = vadd.f32 0.0, %v534
        %536 = vmatmul.f32.gmra.mxu0 %v312
        %v537 = vpop.f32.mrf.mxu0
        %v538 = vadd.f32 0.0, %v537
        %539 = vmatmul.f32.gmra.mxu0 %v315
        %v540 = vpop.f32.mrf.mxu0
        %v541 = vadd.f32 0.0, %v540
        %542 = vmatmul.f32.gmra.mxu0 %v318
        %v543 = vpop.f32.mrf.mxu0
        %v544 = vadd.f32 0.0, %v543
        %545 = vmatmul.f32.gmra.mxu0 %v321
        %v546 = vpop.f32.mrf.mxu0
        %v547 = vadd.f32 0.0, %v546
        %548 = vmatmul.f32.gmra.mxu0 %v324
        %v549 = vpop.f32.mrf.mxu0
        %v550 = vadd.f32 0.0, %v549
        %551 = vmatmul.f32.gmra.mxu0 %v327
        %v552 = vpop.f32.mrf.mxu0
        %v553 = vadd.f32 0.0, %v552
        %554 = vmatmul.f32.gmra.mxu0 %v330
        %v555 = vpop.f32.mrf.mxu0
        %v556 = vadd.f32 0.0, %v555
        %557 = vmatmul.f32.gmra.mxu0 %v333
        %v558 = vpop.f32.mrf.mxu0
        %v559 = vadd.f32 0.0, %v558
        %560 = vmatmul.f32.gmra.mxu0 %v336
        %v561 = vpop.f32.mrf.mxu0
        %v562 = vadd.f32 0.0, %v561
        %563 = vmatmul.f32.gmra.mxu0 %v339
        %v564 = vpop.f32.mrf.mxu0
        %v565 = vadd.f32 0.0, %v564
        %566 = vmatmul.f32.gmra.mxu0 %v342
        %v567 = vpop.f32.mrf.mxu0
        %v568 = vadd.f32 0.0, %v567
        %569 = vmatmul.f32.gmra.mxu0 %v345
        %v570 = vpop.f32.mrf.mxu0
        %v571 = vadd.f32 0.0, %v570
        %572 = vmatmul.f32.gmra.mxu0 %v348
        %v573 = vpop.f32.mrf.mxu0
        %v574 = vadd.f32 0.0, %v573
        %575 = vdwg.mxu0
        %576 = vst [vmem:[%s196] sm:$0xff] %v368
        %577 = vst [vmem:[%s196 + $0x8] sm:$0xff] %v481
        %578 = vst [vmem:[%s196 + $0x10] sm:$0xff] %v371
        %579 = vst [vmem:[%s196 + $0x18] sm:$0xff] %v484
        %580 = vst [vmem:[%s196 + $0x20] sm:$0xff] %v374
        %581 = vst [vmem:[%s196 + $0x28] sm:$0xff] %v487
        %582 = vst [vmem:[%s196 + $0x30] sm:$0xff] %v377
        %583 = vst [vmem:[%s196 + $0x38] sm:$0xff] %v490
        %584 = vst [vmem:[%s196 + $0x40] sm:$0xff] %v380
        %585 = vst [vmem:[%s196 + $0x48] sm:$0xff] %v493
        %586 = vst [vmem:[%s196 + $0x50] sm:$0xff] %v383
        %587 = vst [vmem:[%s196 + $0x58] sm:$0xff] %v496
        %588 = vst [vmem:[%s196 + $0x60] sm:$0xff] %v386
        %589 = vst [vmem:[%s196 + $0x68] sm:$0xff] %v499
        %590 = vst [vmem:[%s196 + $0x70] sm:$0xff] %v389
        %591 = vst [vmem:[%s196 + $0x78] sm:$0xff] %v502
        %592 = vst [vmem:[%s196 + $0x80] sm:$0xff] %v392
        %593 = vst [vmem:[%s196 + $0x88] sm:$0xff] %v505
        %594 = vst [vmem:[%s196 + $0x90] sm:$0xff] %v395
        %595 = vst [vmem:[%s196 + $0x98] sm:$0xff] %v508
        %596 = vst [vmem:[%s196 + $0xa0] sm:$0xff] %v398
        %597 = vst [vmem:[%s196 + $0xa8] sm:$0xff] %v511
        %598 = vst [vmem:[%s196 + $0xb0] sm:$0xff] %v401
        %599 = vst [vmem:[%s196 + $0xb8] sm:$0xff] %v514
        %600 = vst [vmem:[%s196 + $0xc0] sm:$0xff] %v404
        %601 = vst [vmem:[%s196 + $0xc8] sm:$0xff] %v517
        %602 = vst [vmem:[%s196 + $0xd0] sm:$0xff] %v407
        %603 = vst [vmem:[%s196 + $0xd8] sm:$0xff] %v520
        %604 = vst [vmem:[%s196 + $0xe0] sm:$0xff] %v410
        %605 = vst [vmem:[%s196 + $0xe8] sm:$0xff] %v523
        %606 = vst [vmem:[%s196 + $0xf0] sm:$0xff] %v413
        %607 = vst [vmem:[%s196 + $0xf8] sm:$0xff] %v526
        %608 = vst [vmem:[%s196 + $0x100] sm:$0xff] %v416
        %609 = vst [vmem:[%s196 + $0x108] sm:$0xff] %v529
        %610 = vst [vmem:[%s196 + $0x110] sm:$0xff] %v419
        %611 = vst [vmem:[%s196 + $0x118] sm:$0xff] %v532
        %612 = vst [vmem:[%s196 + $0x120] sm:$0xff] %v422
        %613 = vst [vmem:[%s196 + $0x128] sm:$0xff] %v535
        %614 = vst [vmem:[%s196 + $0x130] sm:$0xff] %v425
        %615 = vst [vmem:[%s196 + $0x138] sm:$0xff] %v538
        %616 = vst [vmem:[%s196 + $0x140] sm:$0xff] %v428
        %617 = vst [vmem:[%s196 + $0x148] sm:$0xff] %v541
        %618 = vst [vmem:[%s196 + $0x150] sm:$0xff] %v431
        %619 = vst [vmem:[%s196 + $0x158] sm:$0xff] %v544
        %620 = vst [vmem:[%s196 + $0x160] sm:$0xff] %v434
        %621 = vst [vmem:[%s196 + $0x168] sm:$0xff] %v547
        %622 = vst [vmem:[%s196 + $0x170] sm:$0xff] %v437
        %623 = vst [vmem:[%s196 + $0x178] sm:$0xff] %v550
        %624 = vst [vmem:[%s196 + $0x180] sm:$0xff] %v440
        %625 = vst [vmem:[%s196 + $0x188] sm:$0xff] %v553
        %626 = vst [vmem:[%s196 + $0x190] sm:$0xff] %v443
        %627 = vst [vmem:[%s196 + $0x198] sm:$0xff] %v556
        %628 = vst [vmem:[%s196 + $0x1a0] sm:$0xff] %v446
        %629 = vst [vmem:[%s196 + $0x1a8] sm:$0xff] %v559
        %630 = vst [vmem:[%s196 + $0x1b0] sm:$0xff] %v449
        %631 = vst [vmem:[%s196 + $0x1b8] sm:$0xff] %v562
        %632 = vst [vmem:[%s196 + $0x1c0] sm:$0xff] %v452
        %633 = vst [vmem:[%s196 + $0x1c8] sm:$0xff] %v565
        %634 = vst [vmem:[%s196 + $0x1d0] sm:$0xff] %v455
        %635 = vst [vmem:[%s196 + $0x1d8] sm:$0xff] %v568
        %636 = vst [vmem:[%s196 + $0x1e0] sm:$0xff] %v458
        %637 = vst [vmem:[%s196 + $0x1e8] sm:$0xff] %v571
        %638 = vst [vmem:[%s196 + $0x1f0] sm:$0xff] %v461
        %639 = vst [vmem:[%s196 + $0x1f8] sm:$0xff] %v574
        %s640 = sand.u32 %s103, 1
        %s641 = scalar_lea.sflag [#allocation3], %s640
        %s642 = sand.u32 %s103, 1
        %s643 = smul.addr %s642, 512
        %s644 = scalar_lea.vmem [#allocation2], %s643
        // Predicated region
        $region29: #{correlation_volume_flat.1} parent=27 // pred_check
          %p645 = pneg %p113
        $region30: #{correlation_volume_flat.1} parent=27 // pred_check_branch
          %647 = sbr.rel (%p645) target = $region32
        $region31: #{correlation_volume_flat.1} parent=27 // pred_region
          %s648 = smul.u32 32, %s21
          %s649 = smul.u32 2, %s23
          %651 = vsyncadd %s641, 0
          %s652 = smul.addr %s648, 2
          %s653 = sadd.s32 %s649, %s652
          %s654 = smul.addr %s22, 64
          %s655 = sadd.s32 %s653, %s654
          %s656 = smul.addr %s655, 8
          %s657 = scalar_lea.hbm %s2, %s656
          %s658 = sshll.u32 %s644, 4
          %s659 = int_to_ptr.vmem [resolvable:$true] %s658
          %s660 = sshll.u32 %s657, 4
          %s661 = int_to_ptr.hbm [resolvable:$true] %s660
          %666 = dma.vmem_to_hbm [thread:$0]  %s659, 8192, %s661, %s641, 256, 256, 16
        $region32: #{correlation_volume_flat.1} parent=27 // pred_fallthru
          _
      $region28: #{correlation_volume_flat.1} parent=5 // pred_fallthru
        _
      %p667 = scmp.le.s32.totalorder 2, %s11
      // Predicated region
      $region33: #{correlation_volume_flat.1} parent=5 // pred_check
        %p668 = pneg %p667
      $region34: #{correlation_volume_flat.1} parent=5 // pred_check_branch
        %670 = sbr.rel (%p668) target = $region36
      $region35: #{correlation_volume_flat.1} parent=5 // pred_region
        %s671 = ssub.s32 %s11, 2
        // Predicated region
        $region37: #{correlation_volume_flat.1} parent=35 // pred_check
          %p672 = pneg %p119
        $region38: #{correlation_volume_flat.1} parent=35 // pred_check_branch
          %674 = sbr.rel (%p672) target = $region40
        $region39: #{correlation_volume_flat.1} parent=35 // pred_region
          %s675 = sand.u32 %s104, 1
          %s676 = scalar_lea.sflag [#allocation3], %s675
          %s677 = sand.u32 %s104, 1
          %s678 = smul.addr %s677, 512
          %s679 = scalar_lea.vmem [#allocation2], %s678
          %681 = dma.done %s676, 8192
        $region40: #{correlation_volume_flat.1} parent=35 // pred_fallthru
          _
      $region36: #{correlation_volume_flat.1} parent=5 // pred_fallthru
        _
    $region6: #{correlation_volume_flat.1} parent=1 // loop_footer
      %s15 = sadd.s32 1, %s11
    $region7: #{correlation_volume_flat.1} parent=1 // loop_footer_branch
      %10 = sbr.rel target = $region3
    $region8: #{correlation_volume_flat.1} parent=1 // loop_exit
      _
    %682 = vsyncpa [#allocation3], 1
    %s683 = scalar_lea.sflag [#allocation3], 1
    %684 = vsyncpa %s683, 1

</llo_original>
